<compile_context>
chip_gen: v7x
topology: tpu7x:2x2x1
jax: 0.10.0
libtpu: 0.0.40
codegen_flags: <defaults>
</compile_context>

<pallas_src>
import functools

import jax
import jax.numpy as jnp
from jax.experimental import pallas as pl
from jax.experimental.pallas import tpu as pltpu


def _ln_rowwise_kernel(x_ref, gamma_ref, beta_ref, o_ref, *, eps):
    # x_ref: (T, H); gamma_ref / beta_ref: (1, H).  One normalization per row.
    x = x_ref[...].astype(jnp.float32)
    mean = jnp.mean(x, axis=-1, keepdims=True)
    xc = x - mean                                     # reused for var and y
    var = jnp.mean(xc * xc, axis=-1, keepdims=True)   # biased variance
    inv = jax.lax.rsqrt(var + eps)                    # EUP, no divide
    o_ref[...] = (xc * inv * gamma_ref[...].astype(jnp.float32)
                  + beta_ref[...].astype(jnp.float32)).astype(o_ref.dtype)


def _ln_segmented_kernel(x_ref, avg_ref, gamma_ref, beta_ref, o_ref, *, eps):
    # Lane-packed path: each (1, 128) row of x_ref holds k = 128 // H
    # independent length-H segments.  avg_ref is a (128, 128) block-diagonal
    # averaging matrix, so x @ avg broadcasts each segment's mean across that
    # segment.  The reductions ride the otherwise-idle MXU; loads/stores stay
    # fully lane-dense instead of masked H-lane partial stores.
    x = x_ref[...].astype(jnp.float32)
    avg = avg_ref[...]
    mean = jnp.dot(x, avg, preferred_element_type=jnp.float32,
                   precision=jax.lax.Precision.HIGHEST)
    xc = x - mean
    var = jnp.dot(xc * xc, avg, preferred_element_type=jnp.float32,
                  precision=jax.lax.Precision.HIGHEST)   # biased variance
    inv = jax.lax.rsqrt(var + eps)
    o_ref[...] = (xc * inv * gamma_ref[...].astype(jnp.float32)
                  + beta_ref[...].astype(jnp.float32)).astype(o_ref.dtype)


def _pick_vmem_limit_bytes():
    # Generation-aware scoped-VMEM limit: v5e/v6e have 128 MiB physical VMEM,
    # v7x only 64 MiB per TensorCore.  Keep ~25% headroom for Mosaic scratch.
    try:
        info = pltpu.get_tpu_info()
        phys = int(getattr(info, "vmem_capacity_bytes", 64 * 1024 * 1024))
    except Exception:
        phys = 64 * 1024 * 1024          # assume the smallest (v7x) if query fails
    return min(96 * 1024 * 1024, (phys * 3) // 4)


def _choose_tile_rows(rows, width, itemsize, vmem_limit_bytes):
    """Tile rows: big enough (~4 MiB of input per step) to amortize the
    ~0.35 us/step pipeline overhead, small enough that the double-buffered
    in/out tiles *plus* the in-kernel f32 working set fit the scoped VMEM."""
    row_align = 16 if itemsize <= 2 else 8
    row_bytes = width * itemsize
    # Per-row VMEM: 2x double-buffered input + 2x output tiles in the input
    # dtype, plus the f32 upcast copy and ~one full-tile f32 intermediate.
    per_row_vmem = 4 * row_bytes + 2 * width * 4
    budget = (vmem_limit_bytes * 3) // 4              # headroom for Mosaic scratch
    max_rows_vmem = max(row_align, budget // per_row_vmem)
    target_rows = max(row_align, (4 * 1024 * 1024) // row_bytes)   # ~4 MiB tile

    rows_rounded = rows + (-rows) % row_align
    tile = min(max_rows_vmem, target_rows, rows_rounded)
    tile = max(row_align, (tile // row_align) * row_align)

    # v7x runs the 1-D "parallel" grid on 2 TensorCores: prefer an even grid
    # with >= 4 steps, but never shrink a step below ~2 MiB of input
    # (no-op on v5e/v6e and for small inputs).
    min_split_rows = max(row_align, (2 * 1024 * 1024) // row_bytes)
    steps = pl.cdiv(rows, tile)
    while steps < 8 and (steps < 4 or steps % 2 != 0):
        new_tile = max(row_align, ((tile // 2) // row_align) * row_align)
        if new_tile == tile or new_tile < min_split_rows:
            break
        tile = new_tile
        steps = pl.cdiv(rows, tile)
    return tile


def layer_normalization(x, gamma, beta, eps=1e-5, tile_rows=None):
    """Pallas LayerNorm matching the PyTorch module: normalizes jointly over
    the trailing len(gamma.shape) dims, biased variance, eps inside the sqrt,
    then gamma * y + beta."""
    norm_ndim = max(gamma.ndim, 1)
    H = 1
    for d in gamma.shape:
        H *= int(d)
    rows = 1
    for d in x.shape[: x.ndim - norm_ndim]:
        rows *= int(d)

    itemsize = jnp.dtype(x.dtype).itemsize
    vmem_limit = _pick_vmem_limit_bytes()

    # Lane-dense packing for sub-128 hidden sizes: fold k = 128 // H rows into
    # one 128-lane row so loads/stores use the full vreg lane width.
    pack = 1
    if H < 128 and 128 % H == 0 and rows % (128 // H) == 0:
        pack = 128 // H
    # TODO(synk): an H that is neither >=128 nor a divisor of 128 (or a row
    # count that does not fold evenly) stays lane-sparse on the rowwise path.

    width = pack * H
    rows_p = rows // pack
    x2 = x.reshape(rows_p, width)
    gamma2 = jnp.tile(gamma.reshape(-1), pack).reshape(1, width)
    beta2 = jnp.tile(beta.reshape(-1), pack).reshape(1, width)

    if tile_rows is None:
        tile_rows = _choose_tile_rows(rows_p, width, itemsize, vmem_limit)
    num_tiles = pl.cdiv(rows_p, tile_rows)      # grid over-covers ragged rows

    x_spec = pl.BlockSpec((tile_rows, width), lambda i: (i, 0))
    par_spec = pl.BlockSpec((1, width), lambda i: (0, 0))

    # Advisory cost estimate: pure streaming traffic (no pad/slice passes).
    flops = 10 * rows * H
    bytes_accessed = 2 * rows * H * itemsize + 2 * width * 4
    if pack > 1:
        flops += 2 * 2 * rows_p * width * width      # two MXU reduction matmuls
        bytes_accessed += width * width * 4

    if pack > 1:
        seg = jnp.arange(width, dtype=jnp.int32) // H
        avg = jnp.where(seg[:, None] == seg[None, :],
                        jnp.float32(1.0 / H), jnp.float32(0.0))
        kernel = functools.partial(_ln_segmented_kernel, eps=eps)
        in_specs = [x_spec,
                    pl.BlockSpec((width, width), lambda i: (0, 0)),
                    par_spec, par_spec]
        inputs = (x2, avg, gamma2, beta2)
    else:
        kernel = functools.partial(_ln_rowwise_kernel, eps=eps)
        in_specs = [x_spec, par_spec, par_spec]
        inputs = (x2, gamma2, beta2)

    out2 = pl.pallas_call(
        kernel,
        out_shape=jax.ShapeDtypeStruct((rows_p, width), x.dtype),
        grid_spec=pltpu.PrefetchScalarGridSpec(
            num_scalar_prefetch=0,
            grid=(num_tiles,),
            in_specs=in_specs,
            out_specs=pl.BlockSpec((tile_rows, width), lambda i: (i, 0)),
        ),
        compiler_params=pltpu.CompilerParams(
            dimension_semantics=("parallel",),
            vmem_limit_bytes=vmem_limit,
        ),
        cost_estimate=pl.CostEstimate(
            flops=flops, transcendentals=rows, bytes_accessed=bytes_accessed),
    )(*inputs)

    return out2.reshape(x.shape)


if __name__ == "__main__":
    eps = 1e-5

    def ref_ln(x, gamma, beta):
        mean = jnp.mean(x, axis=-1, keepdims=True)
        var = jnp.mean((x - mean) ** 2, axis=-1, keepdims=True)
        return gamma * ((x - mean) / jnp.sqrt(var + eps)) + beta

    key = jax.random.PRNGKey(0)
    kx, kg, kb = jax.random.split(key, 3)

    # 1) Module-init parameters (gamma=1, beta=0), H=32 -> lane-packed MXU path.
    batch, seq, hidden = 2, 8, 32
    x = jax.random.normal(kx, (batch, seq, hidden), dtype=jnp.float32)
    gamma = jnp.ones((hidden,), dtype=jnp.float32)
    beta = jnp.zeros((hidden,), dtype=jnp.float32)
    out = jax.block_until_ready(layer_normalization(x, gamma, beta, eps=eps))
    assert jnp.allclose(out, ref_ln(x, gamma, beta), atol=2e-5, rtol=2e-5), \
        "mismatch vs reference (packed path, unit affine)"

    # 2) Non-trivial affine params on the lane-packed path (checks gamma tiling).
    gamma_r = jax.random.normal(kg, (hidden,), dtype=jnp.float32)
    beta_r = jax.random.normal(kb, (hidden,), dtype=jnp.float32)
    x3 = jax.random.normal(kg, (4, 16, hidden), dtype=jnp.float32)
    out3 = jax.block_until_ready(layer_normalization(x3, gamma_r, beta_r, eps=eps))
    assert jnp.allclose(out3, ref_ln(x3, gamma_r, beta_r), atol=2e-5, rtol=2e-5), \
        "mismatch vs reference (packed path, random affine)"

    # 3) Ragged row count (21 rows, not foldable) -> rowwise path, masked last block.
    x4 = jax.random.normal(kb, (3, 7, hidden), dtype=jnp.float32)
    out4 = jax.block_until_ready(layer_normalization(x4, gamma_r, beta_r, eps=eps))
    assert jnp.allclose(out4, ref_ln(x4, gamma_r, beta_r), atol=2e-5, rtol=2e-5), \
        "mismatch vs reference (rowwise path, ragged rows)"

    print("KERNEL_OK")
</pallas_src>

<mosaic_0001>
module attributes {stable_mosaic.version = 11 : i64} {
  func.func @_ln_segmented_kernel(%arg0: i32, %arg1: memref<8x128xf32, #tpu.memory_space<vmem>>, %arg2: memref<128x128xf32, #tpu.memory_space<vmem>>, %arg3: memref<1x128xf32, #tpu.memory_space<vmem>>, %arg4: memref<1x128xf32, #tpu.memory_space<vmem>>, %arg5: memref<8x128xf32, #tpu.memory_space<vmem>>) attributes {dimension_semantics = [#tpu.dimension_semantics<parallel>], iteration_bounds = array<i64: 1>, scalar_prefetch = 0 : i64, scratch_operands = 0 : i64, tpu.core_type = #tpu.core_type<tc>, window_params = [{transform_indices = @transform_0, window_bounds = array<i64: 8, 128>}, {pipeline_mode = #tpu.pipeline_mode<synchronous>, transform_indices = @transform_1, window_bounds = array<i64: 128, 128>}, {pipeline_mode = #tpu.pipeline_mode<synchronous>, transform_indices = @transform_2, window_bounds = array<i64: 1, 128>}, {pipeline_mode = #tpu.pipeline_mode<synchronous>, transform_indices = @transform_3, window_bounds = array<i64: 1, 128>}, {transform_indices = @transform_4, window_bounds = array<i64: 8, 128>}]} {
    %c0 = arith.constant 0 : index
    %c0_0 = arith.constant 0 : index
    %0 = vector.load %arg1[%c0, %c0_0] : memref<8x128xf32, #tpu.memory_space<vmem>>, vector<8x128xf32>
    %c0_1 = arith.constant 0 : index
    %c0_2 = arith.constant 0 : index
    %1 = vector.load %arg2[%c0_1, %c0_2] : memref<128x128xf32, #tpu.memory_space<vmem>>, vector<128x128xf32>
    %cst = arith.constant dense<0.000000e+00> : vector<8x128xf32>
    %2 = tpu.matmul %0, %1, %cst {dimension_numbers = #tpu.dot_dimension_numbers<[1], [0], [0], [1], [0, 0, 1, 1], [], []>, precision = #tpu.contract_precision<fp32>} : vector<8x128xf32>, vector<128x128xf32>, vector<8x128xf32> -> vector<8x128xf32>
    %3 = arith.subf %0, %2 : vector<8x128xf32>
    %4 = arith.mulf %3, %3 : vector<8x128xf32>
    %cst_3 = arith.constant dense<0.000000e+00> : vector<8x128xf32>
    %5 = tpu.matmul %4, %1, %cst_3 {dimension_numbers = #tpu.dot_dimension_numbers<[1], [0], [0], [1], [0, 0, 1, 1], [], []>, precision = #tpu.contract_precision<fp32>} : vector<8x128xf32>, vector<128x128xf32>, vector<8x128xf32> -> vector<8x128xf32>
    %cst_4 = arith.constant 9.99999974E-6 : f32
    %6 = vector.broadcast %cst_4 : f32 to vector<8x128xf32>
    %7 = arith.addf %5, %6 : vector<8x128xf32>
    %8 = math.rsqrt %7 : vector<8x128xf32>
    %9 = arith.mulf %3, %8 : vector<8x128xf32>
    %c0_5 = arith.constant 0 : index
    %c0_6 = arith.constant 0 : index
    %10 = vector.load %arg3[%c0_5, %c0_6] : memref<1x128xf32, #tpu.memory_space<vmem>>, vector<1x128xf32>
    %11 = vector.broadcast %10 : vector<1x128xf32> to vector<8x128xf32>
    %12 = arith.mulf %9, %11 : vector<8x128xf32>
    %c0_7 = arith.constant 0 : index
    %c0_8 = arith.constant 0 : index
    %13 = vector.load %arg4[%c0_7, %c0_8] : memref<1x128xf32, #tpu.memory_space<vmem>>, vector<1x128xf32>
    %14 = vector.broadcast %13 : vector<1x128xf32> to vector<8x128xf32>
    %15 = arith.addf %12, %14 : vector<8x128xf32>
    %c0_9 = arith.constant 0 : index
    %c0_10 = arith.constant 0 : index
    %16 = vector.load %arg5[%c0_9, %c0_10] : memref<8x128xf32, #tpu.memory_space<vmem>>, vector<8x128xf32>
    tpu.vector_store %arg5[%c0_9, %c0_10], %15 {strides = array<i32>} : memref<8x128xf32, #tpu.memory_space<vmem>>, vector<8x128xf32>,
    return
  }
  func.func @transform_0(%arg0: i32) -> (i32, i32) {
    %c0_i32 = arith.constant 0 : i32
    %c0_i32_0 = arith.constant 0 : i32
    return %arg0, %c0_i32 : i32, i32
  }
  func.func @transform_1(%arg0: i32) -> (i32, i32) {
    %c0_i32 = arith.constant 0 : i32
    %c0_i32_0 = arith.constant 0 : i32
    %c0_i32_1 = arith.constant 0 : i32
    return %c0_i32, %c0_i32_0 : i32, i32
  }
  func.func @transform_2(%arg0: i32) -> (i32, i32) {
    %c0_i32 = arith.constant 0 : i32
    %c0_i32_0 = arith.constant 0 : i32
    %c0_i32_1 = arith.constant 0 : i32
    return %c0_i32, %c0_i32_0 : i32, i32
  }
  func.func @transform_3(%arg0: i32) -> (i32, i32) {
    %c0_i32 = arith.constant 0 : i32
    %c0_i32_0 = arith.constant 0 : i32
    %c0_i32_1 = arith.constant 0 : i32
    return %c0_i32, %c0_i32_0 : i32, i32
  }
  func.func @transform_4(%arg0: i32) -> (i32, i32) {
    %c0_i32 = arith.constant 0 : i32
    %c0_i32_0 = arith.constant 0 : i32
    return %arg0, %c0_i32 : i32, i32
  }
}

</mosaic_0001>

<llo_original>
// kernel: tpu_custom_call.1
$region0: #{tpu_custom_call.1}
  #allocation0 [shape = 'u32[]', space=smem, size = 0x4, offset = 0x4, fixed_abs, tag = 'smem constant byte address 0x4 - core index']
  #allocation1 [shape = 'u32[144,128]{1,0:T(1,128)}', space=vmem, size = 0x12000, scoped, tag = 'internal scratch']
  %s0 = inlined_call_operand.hbm [shape: f32[4,128], index: 0, kind: input, shape index: {}]
  %s1 = inlined_call_operand.hbm [shape: f32[128,128], index: 1, kind: input, shape index: {}]
  %s2 = inlined_call_operand.vmem [shape: f32[1,128], index: 2, kind: input, shape index: {}]
  %s3 = inlined_call_operand.vmem [shape: f32[1,128], index: 3, kind: input, shape index: {}]
  %s4 = inlined_call_operand.hbm [shape: f32[4,128], index: 4, kind: output, shape index: {}]
  %s5 = sld [smem:[#allocation0]]
  $region34: #{tpu_custom_call.1} parent=0
    _
  %s7 = ssub.s32 1, %s5
  %s8 = scalar_select 0, %s7, %s5
  $region1: #{tpu_custom_call.1} parent=0
    #allocation2 [shape = 'u8[4096]{0}', space=vmem, size = 0x1000, scoped, tag = 'input window, operand 0, single buffered']
    #allocation3 [shape = 's32[1]{0}', space=sflag, size = 0x4, scoped, tag = 'scoped memory for tpu_custom_call.1']
    #allocation4 [shape = 's32[1]{0}', space=sflag, size = 0x4, scoped, tag = 'scoped memory for tpu_custom_call.1']
    #allocation5 [shape = 'u8[65536]{0}', space=vmem, size = 0x10000, scoped, tag = 'input window, operand 1, single buffered']
    #allocation6 [shape = 's32[1]{0}', space=sflag, size = 0x4, scoped, tag = 'scoped memory for tpu_custom_call.1']
    #allocation7 [shape = 'u8[4096]{0}', space=vmem, size = 0x1000, scoped, tag = 'output window, operand 0, single buffered']
    %9 = vsyncpa [#allocation3], 0
    %10 = vsyncpa [#allocation6], 0
    %11 = vsyncpa [#allocation4], 0
    // Predicated region
    $region2: #{tpu_custom_call.1} parent=1 // pred_check
      _
    $region3: #{tpu_custom_call.1} parent=1 // pred_check_branch
      %13 = sbr.rel (0) target = $region5
    $region4: #{tpu_custom_call.1} parent=1 // pred_region
      %s15 = ssub.s32 128, 64
      %16 = vsyncadd [#allocation3], %s15
      %s17 = sshll.u32 [#allocation2], 4
      %s18 = int_to_ptr.vmem [resolvable:$true] %s17
      %23 = dma.hbm_to_vmem [thread:$0]  %s0, 64, %s18, [#allocation3], 64, 64, 4
    $region5: #{tpu_custom_call.1} parent=1 // pred_fallthru
      _
    // Predicated region
    $region6: #{tpu_custom_call.1} parent=1 // pred_check
      _
    $region7: #{tpu_custom_call.1} parent=1 // pred_check_branch
      %25 = sbr.rel (0) target = $region9
    $region8: #{tpu_custom_call.1} parent=1 // pred_region
      %s27 = ssub.s32 2048, 2048
      %28 = vsyncadd [#allocation6], %s27
      %s29 = sshll.u32 [#allocation5], 4
      %s30 = int_to_ptr.vmem [resolvable:$true] %s29
      %35 = dma.hbm_to_vmem [thread:$0]  %s1, 2048, %s30, [#allocation6], 128, 128, 8
    $region9: #{tpu_custom_call.1} parent=1 // pred_fallthru
      _
    // Predicated region
    $region10: #{tpu_custom_call.1} parent=1 // pred_check
      _
    $region11: #{tpu_custom_call.1} parent=1 // pred_check_branch
      %37 = sbr.rel (0) target = $region13
    $region12: #{tpu_custom_call.1} parent=1 // pred_region
      _
    $region13: #{tpu_custom_call.1} parent=1 // pred_fallthru
      _
    // Predicated region
    $region14: #{tpu_custom_call.1} parent=1 // pred_check
      _
    $region15: #{tpu_custom_call.1} parent=1 // pred_check_branch
      %39 = sbr.rel (0) target = $region17
    $region16: #{tpu_custom_call.1} parent=1 // pred_region
      _
    $region17: #{tpu_custom_call.1} parent=1 // pred_fallthru
      _
    // Predicated region
    $region18: #{tpu_custom_call.1} parent=1 // pred_check
      _
    $region19: #{tpu_custom_call.1} parent=1 // pred_check_branch
      %41 = sbr.rel (0) target = $region21
    $region20: #{tpu_custom_call.1} parent=1 // pred_region
      %42 = dma.done [#allocation3], 128
    $region21: #{tpu_custom_call.1} parent=1 // pred_fallthru
      _
    // Predicated region
    $region22: #{tpu_custom_call.1} parent=1 // pred_check
      _
    $region23: #{tpu_custom_call.1} parent=1 // pred_check_branch
      %44 = sbr.rel (0) target = $region25
    $region24: #{tpu_custom_call.1} parent=1 // pred_region
      %45 = dma.done [#allocation6], 2048
    $region25: #{tpu_custom_call.1} parent=1 // pred_fallthru
      _
    %v46 = vld [vmem:[#allocation2] sm:$0xff]
    %v47 = vld [vmem:[#allocation5] sm:$0xff]
    %v48 = vld [vmem:[#allocation5 + $0x8] sm:$0xff]
    %v49 = vld [vmem:[#allocation5 + $0x10] sm:$0xff]
    %v50 = vld [vmem:[#allocation5 + $0x18] sm:$0xff]
    %v51 = vld [vmem:[#allocation5 + $0x20] sm:$0xff]
    %v52 = vld [vmem:[#allocation5 + $0x28] sm:$0xff]
    %v53 = vld [vmem:[#allocation5 + $0x30] sm:$0xff]
    %v54 = vld [vmem:[#allocation5 + $0x38] sm:$0xff]
    %v55 = vld [vmem:[#allocation5 + $0x40] sm:$0xff]
    %v56 = vld [vmem:[#allocation5 + $0x48] sm:$0xff]
    %v57 = vld [vmem:[#allocation5 + $0x50] sm:$0xff]
    %v58 = vld [vmem:[#allocation5 + $0x58] sm:$0xff]
    %v59 = vld [vmem:[#allocation5 + $0x60] sm:$0xff]
    %v60 = vld [vmem:[#allocation5 + $0x68] sm:$0xff]
    %v61 = vld [vmem:[#allocation5 + $0x70] sm:$0xff]
    %v62 = vld [vmem:[#allocation5 + $0x78] sm:$0xff]
    %63 = vmatprep.subr.mxu0 0.0
    %v64 = vand.u32 %v47, 4294901760
    %65 = vmatpush1.msra.mxu0 %v64
    %66 = vmatprep.subr.mxu0 0.0
    %v67 = vand.u32 %v48, 4294901760
    %68 = vmatpush1.msra.mxu0 %v67
    %69 = vmatprep.subr.mxu0 0.0
    %v70 = vand.u32 %v49, 4294901760
    %71 = vmatpush1.msra.mxu0 %v70
    %72 = vmatprep.subr.mxu0 0.0
    %v73 = vand.u32 %v50, 4294901760
    %74 = vmatpush1.msra.mxu0 %v73
    %75 = vmatprep.subr.mxu0 0.0
    %v76 = vand.u32 %v51, 4294901760
    %77 = vmatpush1.msra.mxu0 %v76
    %78 = vmatprep.subr.mxu0 0.0
    %v79 = vand.u32 %v52, 4294901760
    %80 = vmatpush1.msra.mxu0 %v79
    %81 = vmatprep.subr.mxu0 0.0
    %v82 = vand.u32 %v53, 4294901760
    %83 = vmatpush1.msra.mxu0 %v82
    %84 = vmatprep.subr.mxu0 0.0
    %v85 = vand.u32 %v54, 4294901760
    %86 = vmatpush1.msra.mxu0 %v85
    %87 = vmatprep.subr.mxu0 0.0
    %v88 = vand.u32 %v55, 4294901760
    %89 = vmatpush1.msra.mxu0 %v88
    %90 = vmatprep.subr.mxu0 0.0
    %v91 = vand.u32 %v56, 4294901760
    %92 = vmatpush1.msra.mxu0 %v91
    %93 = vmatprep.subr.mxu0 0.0
    %v94 = vand.u32 %v57, 4294901760
    %95 = vmatpush1.msra.mxu0 %v94
    %96 = vmatprep.subr.mxu0 0.0
    %v97 = vand.u32 %v58, 4294901760
    %98 = vmatpush1.msra.mxu0 %v97
    %99 = vmatprep.subr.mxu0 0.0
    %v100 = vand.u32 %v59, 4294901760
    %101 = vmatpush1.msra.mxu0 %v100
    %102 = vmatprep.subr.mxu0 0.0
    %v103 = vand.u32 %v60, 4294901760
    %104 = vmatpush1.msra.mxu0 %v103
    %105 = vmatprep.subr.mxu0 0.0
    %v106 = vand.u32 %v61, 4294901760
    %107 = vmatpush1.msra.mxu0 %v106
    %108 = vmatprep.subr.mxu0 0.0
    %v109 = vand.u32 %v62, 4294901760
    %110 = vmatpush1.msra.mxu0 %v109
    %111 = vmatprep.subr.mxu0 0.0
    %112 = vmatpush1.msra.mxu0 0.0
    %113 = vmatprep.subr.mxu0 0.0
    %114 = vmatpush1.msra.mxu0 0.0
    %115 = vmatprep.subr.mxu0 0.0
    %116 = vmatpush1.msra.mxu0 0.0
    %117 = vmatprep.subr.mxu0 0.0
    %118 = vmatpush1.msra.mxu0 0.0
    %119 = vmatprep.subr.mxu0 0.0
    %120 = vmatpush1.msra.mxu0 0.0
    %121 = vmatprep.subr.mxu0 0.0
    %122 = vmatpush1.msra.mxu0 0.0
    %123 = vmatprep.subr.mxu0 0.0
    %124 = vmatpush1.msra.mxu0 0.0
    %125 = vmatprep.subr.mxu0 0.0
    %126 = vmatpush1.msra.mxu0 0.0
    %127 = vmatprep.subr.mxu0 0.0
    %128 = vmatpush1.msra.mxu0 0.0
    %129 = vmatprep.subr.mxu0 0.0
    %130 = vmatpush1.msra.mxu0 0.0
    %131 = vmatprep.subr.mxu0 0.0
    %132 = vmatpush1.msra.mxu0 0.0
    %133 = vmatprep.subr.mxu0 0.0
    %134 = vmatpush1.msra.mxu0 0.0
    %135 = vmatprep.subr.mxu0 0.0
    %136 = vmatpush1.msra.mxu0 0.0
    %137 = vmatprep.subr.mxu0 0.0
    %138 = vmatpush1.msra.mxu0 0.0
    %139 = vmatprep.subr.mxu0 0.0
    %140 = vmatpush1.msra.mxu0 0.0
    %141 = vmatprep.subr.mxu0 0.0
    %142 = vmatpush1.msra.mxu0 0.0
    %143 = vmatprep.mubr.f32.mxu0 0.0
    %v144 = vand.u32 %v46, 4294901760
    %v145 = vsub.f32 %v46, %v144
    %v146 = vand.u32 %v145, 4294901760
    %v147 = vsub.f32 %v145, %v146
    %v148 = vand.u32 %v147, 4294901760
    %149 = vmatmul.mubr.f32.gmra.mrb[0].mxu0 %v148
    %v150 = vpop.f32.mrb[0].mxu0
    %v151 = vadd.f32 0.0, %v150
    %v152 = vpop.f32.mrb[0].mxu0
    %153 = vdwg.mxu0
    %154 = vmatprep.subr.mxu0 0.0
    %v155 = vand.u32 %v47, 4294901760
    %v156 = vsub.f32 %v47, %v155
    %v157 = vand.u32 %v156, 4294901760
    %v158 = vsub.f32 %v156, %v157
    %v159 = vand.u32 %v158, 4294901760
    %160 = vmatpush1.msra.mxu0 %v159
    %161 = vmatprep.subr.mxu0 0.0
    %v162 = vand.u32 %v48, 4294901760
    %v163 = vsub.f32 %v48, %v162
    %v164 = vand.u32 %v163, 4294901760
    %v165 = vsub.f32 %v163, %v164
    %v166 = vand.u32 %v165, 4294901760
    %167 = vmatpush1.msra.mxu0 %v166
    %168 = vmatprep.subr.mxu0 0.0
    %v169 = vand.u32 %v49, 4294901760
    %v170 = vsub.f32 %v49, %v169
    %v171 = vand.u32 %v170, 4294901760
    %v172 = vsub.f32 %v170, %v171
    %v173 = vand.u32 %v172, 4294901760
    %174 = vmatpush1.msra.mxu0 %v173
    %175 = vmatprep.subr.mxu0 0.0
    %v176 = vand.u32 %v50, 4294901760
    %v177 = vsub.f32 %v50, %v176
    %v178 = vand.u32 %v177, 4294901760
    %v179 = vsub.f32 %v177, %v178
    %v180 = vand.u32 %v179, 4294901760
    %181 = vmatpush1.msra.mxu0 %v180
    %182 = vmatprep.subr.mxu0 0.0
    %v183 = vand.u32 %v51, 4294901760
    %v184 = vsub.f32 %v51, %v183
    %v185 = vand.u32 %v184, 4294901760
    %v186 = vsub.f32 %v184, %v185
    %v187 = vand.u32 %v186, 4294901760
    %188 = vmatpush1.msra.mxu0 %v187
    %189 = vmatprep.subr.mxu0 0.0
    %v190 = vand.u32 %v52, 4294901760
    %v191 = vsub.f32 %v52, %v190
    %v192 = vand.u32 %v191, 4294901760
    %v193 = vsub.f32 %v191, %v192
    %v194 = vand.u32 %v193, 4294901760
    %195 = vmatpush1.msra.mxu0 %v194
    %196 = vmatprep.subr.mxu0 0.0
    %v197 = vand.u32 %v53, 4294901760
    %v198 = vsub.f32 %v53, %v197
    %v199 = vand.u32 %v198, 4294901760
    %v200 = vsub.f32 %v198, %v199
    %v201 = vand.u32 %v200, 4294901760
    %202 = vmatpush1.msra.mxu0 %v201
    %203 = vmatprep.subr.mxu0 0.0
    %v204 = vand.u32 %v54, 4294901760
    %v205 = vsub.f32 %v54, %v204
    %v206 = vand.u32 %v205, 4294901760
    %v207 = vsub.f32 %v205, %v206
    %v208 = vand.u32 %v207, 4294901760
    %209 = vmatpush1.msra.mxu0 %v208
    %210 = vmatprep.subr.mxu0 0.0
    %v211 = vand.u32 %v55, 4294901760
    %v212 = vsub.f32 %v55, %v211
    %v213 = vand.u32 %v212, 4294901760
    %v214 = vsub.f32 %v212, %v213
    %v215 = vand.u32 %v214, 4294901760
    %216 = vmatpush1.msra.mxu0 %v215
    %217 = vmatprep.subr.mxu0 0.0
    %v218 = vand.u32 %v56, 4294901760
    %v219 = vsub.f32 %v56, %v218
    %v220 = vand.u32 %v219, 4294901760
    %v221 = vsub.f32 %v219, %v220
    %v222 = vand.u32 %v221, 4294901760
    %223 = vmatpush1.msra.mxu0 %v222
    %224 = vmatprep.subr.mxu0 0.0
    %v225 = vand.u32 %v57, 4294901760
    %v226 = vsub.f32 %v57, %v225
    %v227 = vand.u32 %v226, 4294901760
    %v228 = vsub.f32 %v226, %v227
    %v229 = vand.u32 %v228, 4294901760
    %230 = vmatpush1.msra.mxu0 %v229
    %231 = vmatprep.subr.mxu0 0.0
    %v232 = vand.u32 %v58, 4294901760
    %v233 = vsub.f32 %v58, %v232
    %v234 = vand.u32 %v233, 4294901760
    %v235 = vsub.f32 %v233, %v234
    %v236 = vand.u32 %v235, 4294901760
    %237 = vmatpush1.msra.mxu0 %v236
    %238 = vmatprep.subr.mxu0 0.0
    %v239 = vand.u32 %v59, 4294901760
    %v240 = vsub.f32 %v59, %v239
    %v241 = vand.u32 %v240, 4294901760
    %v242 = vsub.f32 %v240, %v241
    %v243 = vand.u32 %v242, 4294901760
    %244 = vmatpush1.msra.mxu0 %v243
    %245 = vmatprep.subr.mxu0 0.0
    %v246 = vand.u32 %v60, 4294901760
    %v247 = vsub.f32 %v60, %v246
    %v248 = vand.u32 %v247, 4294901760
    %v249 = vsub.f32 %v247, %v248
    %v250 = vand.u32 %v249, 4294901760
    %251 = vmatpush1.msra.mxu0 %v250
    %252 = vmatprep.subr.mxu0 0.0
    %v253 = vand.u32 %v61, 4294901760
    %v254 = vsub.f32 %v61, %v253
    %v255 = vand.u32 %v254, 4294901760
    %v256 = vsub.f32 %v254, %v255
    %v257 = vand.u32 %v256, 4294901760
    %258 = vmatpush1.msra.mxu0 %v257
    %259 = vmatprep.subr.mxu0 0.0
    %v260 = vand.u32 %v62, 4294901760
    %v261 = vsub.f32 %v62, %v260
    %v262 = vand.u32 %v261, 4294901760
    %v263 = vsub.f32 %v261, %v262
    %v264 = vand.u32 %v263, 4294901760
    %265 = vmatpush1.msra.mxu0 %v264
    %266 = vmatprep.subr.mxu0 0.0
    %267 = vmatpush1.msra.mxu0 0.0
    %268 = vmatprep.subr.mxu0 0.0
    %269 = vmatpush1.msra.mxu0 0.0
    %270 = vmatprep.subr.mxu0 0.0
    %271 = vmatpush1.msra.mxu0 0.0
    %272 = vmatprep.subr.mxu0 0.0
    %273 = vmatpush1.msra.mxu0 0.0
    %274 = vmatprep.subr.mxu0 0.0
    %275 = vmatpush1.msra.mxu0 0.0
    %276 = vmatprep.subr.mxu0 0.0
    %277 = vmatpush1.msra.mxu0 0.0
    %278 = vmatprep.subr.mxu0 0.0
    %279 = vmatpush1.msra.mxu0 0.0
    %280 = vmatprep.subr.mxu0 0.0
    %281 = vmatpush1.msra.mxu0 0.0
    %282 = vmatprep.subr.mxu0 0.0
    %283 = vmatpush1.msra.mxu0 0.0
    %284 = vmatprep.subr.mxu0 0.0
    %285 = vmatpush1.msra.mxu0 0.0
    %286 = vmatprep.subr.mxu0 0.0
    %287 = vmatpush1.msra.mxu0 0.0
    %288 = vmatprep.subr.mxu0 0.0
    %289 = vmatpush1.msra.mxu0 0.0
    %290 = vmatprep.subr.mxu0 0.0
    %291 = vmatpush1.msra.mxu0 0.0
    %292 = vmatprep.subr.mxu0 0.0
    %293 = vmatpush1.msra.mxu0 0.0
    %294 = vmatprep.subr.mxu0 0.0
    %295 = vmatpush1.msra.mxu0 0.0
    %296 = vmatprep.subr.mxu0 0.0
    %297 = vmatpush1.msra.mxu0 0.0
    %298 = vmatprep.mubr.f32.mxu0 0.0
    %v299 = vand.u32 %v46, 4294901760
    %300 = vmatmul.mubr.f32.gmra.mrb[0].mxu0 %v299
    %v301 = vpop.f32.mrb[0].mxu0
    %v302 = vadd.f32 %v151, %v301
    %v303 = vpop.f32.mrb[0].mxu0
    %304 = vdwg.mxu0
    %305 = vmatprep.subr.mxu0 0.0
    %v306 = vand.u32 %v47, 4294901760
    %v307 = vsub.f32 %v47, %v306
    %308 = vmatpush1.msra.mxu0 %v307
    %309 = vmatprep.subr.mxu0 0.0
    %v310 = vand.u32 %v48, 4294901760
    %v311 = vsub.f32 %v48, %v310
    %312 = vmatpush1.msra.mxu0 %v311
    %313 = vmatprep.subr.mxu0 0.0
    %v314 = vand.u32 %v49, 4294901760
    %v315 = vsub.f32 %v49, %v314
    %316 = vmatpush1.msra.mxu0 %v315
    %317 = vmatprep.subr.mxu0 0.0
    %v318 = vand.u32 %v50, 4294901760
    %v319 = vsub.f32 %v50, %v318
    %320 = vmatpush1.msra.mxu0 %v319
    %321 = vmatprep.subr.mxu0 0.0
    %v322 = vand.u32 %v51, 4294901760
    %v323 = vsub.f32 %v51, %v322
    %324 = vmatpush1.msra.mxu0 %v323
    %325 = vmatprep.subr.mxu0 0.0
    %v326 = vand.u32 %v52, 4294901760
    %v327 = vsub.f32 %v52, %v326
    %328 = vmatpush1.msra.mxu0 %v327
    %329 = vmatprep.subr.mxu0 0.0
    %v330 = vand.u32 %v53, 4294901760
    %v331 = vsub.f32 %v53, %v330
    %332 = vmatpush1.msra.mxu0 %v331
    %333 = vmatprep.subr.mxu0 0.0
    %v334 = vand.u32 %v54, 4294901760
    %v335 = vsub.f32 %v54, %v334
    %336 = vmatpush1.msra.mxu0 %v335
    %337 = vmatprep.subr.mxu0 0.0
    %v338 = vand.u32 %v55, 4294901760
    %v339 = vsub.f32 %v55, %v338
    %340 = vmatpush1.msra.mxu0 %v339
    %341 = vmatprep.subr.mxu0 0.0
    %v342 = vand.u32 %v56, 4294901760
    %v343 = vsub.f32 %v56, %v342
    %344 = vmatpush1.msra.mxu0 %v343
    %345 = vmatprep.subr.mxu0 0.0
    %v346 = vand.u32 %v57, 4294901760
    %v347 = vsub.f32 %v57, %v346
    %348 = vmatpush1.msra.mxu0 %v347
    %349 = vmatprep.subr.mxu0 0.0
    %v350 = vand.u32 %v58, 4294901760
    %v351 = vsub.f32 %v58, %v350
    %352 = vmatpush1.msra.mxu0 %v351
    %353 = vmatprep.subr.mxu0 0.0
    %v354 = vand.u32 %v59, 4294901760
    %v355 = vsub.f32 %v59, %v354
    %356 = vmatpush1.msra.mxu0 %v355
    %357 = vmatprep.subr.mxu0 0.0
    %v358 = vand.u32 %v60, 4294901760
    %v359 = vsub.f32 %v60, %v358
    %360 = vmatpush1.msra.mxu0 %v359
    %361 = vmatprep.subr.mxu0 0.0
    %v362 = vand.u32 %v61, 4294901760
    %v363 = vsub.f32 %v61, %v362
    %364 = vmatpush1.msra.mxu0 %v363
    %365 = vmatprep.subr.mxu0 0.0
    %v366 = vand.u32 %v62, 4294901760
    %v367 = vsub.f32 %v62, %v366
    %368 = vmatpush1.msra.mxu0 %v367
    %369 = vmatprep.subr.mxu0 0.0
    %370 = vmatpush1.msra.mxu0 0.0
    %371 = vmatprep.subr.mxu0 0.0
    %372 = vmatpush1.msra.mxu0 0.0
    %373 = vmatprep.subr.mxu0 0.0
    %374 = vmatpush1.msra.mxu0 0.0
    %375 = vmatprep.subr.mxu0 0.0
    %376 = vmatpush1.msra.mxu0 0.0
    %377 = vmatprep.subr.mxu0 0.0
    %378 = vmatpush1.msra.mxu0 0.0
    %379 = vmatprep.subr.mxu0 0.0
    %380 = vmatpush1.msra.mxu0 0.0
    %381 = vmatprep.subr.mxu0 0.0
    %382 = vmatpush1.msra.mxu0 0.0
    %383 = vmatprep.subr.mxu0 0.0
    %384 = vmatpush1.msra.mxu0 0.0
    %385 = vmatprep.subr.mxu0 0.0
    %386 = vmatpush1.msra.mxu0 0.0
    %387 = vmatprep.subr.mxu0 0.0
    %388 = vmatpush1.msra.mxu0 0.0
    %389 = vmatprep.subr.mxu0 0.0
    %390 = vmatpush1.msra.mxu0 0.0
    %391 = vmatprep.subr.mxu0 0.0
    %392 = vmatpush1.msra.mxu0 0.0
    %393 = vmatprep.subr.mxu0 0.0
    %394 = vmatpush1.msra.mxu0 0.0
    %395 = vmatprep.subr.mxu0 0.0
    %396 = vmatpush1.msra.mxu0 0.0
    %397 = vmatprep.subr.mxu0 0.0
    %398 = vmatpush1.msra.mxu0 0.0
    %399 = vmatprep.subr.mxu0 0.0
    %400 = vmatpush1.msra.mxu0 0.0
    %401 = vmatprep.mubr.f32.mxu0 0.0
    %v402 = vand.u32 %v46, 4294901760
    %v403 = vsub.f32 %v46, %v402
    %404 = vmatmul.mubr.f32.gmra.mrb[0].mxu0 %v403
    %v405 = vpop.f32.mrb[0].mxu0
    %v406 = vadd.f32 %v302, %v405
    %v407 = vpop.f32.mrb[0].mxu0
    %408 = vdwg.mxu0
    %409 = vmatprep.subr.mxu0 0.0
    %v410 = vand.u32 %v47, 4294901760
    %411 = vmatpush1.msra.mxu0 %v410
    %412 = vmatprep.subr.mxu0 0.0
    %v413 = vand.u32 %v48, 4294901760
    %414 = vmatpush1.msra.mxu0 %v413
    %415 = vmatprep.subr.mxu0 0.0
    %v416 = vand.u32 %v49, 4294901760
    %417 = vmatpush1.msra.mxu0 %v416
    %418 = vmatprep.subr.mxu0 0.0
    %v419 = vand.u32 %v50, 4294901760
    %420 = vmatpush1.msra.mxu0 %v419
    %421 = vmatprep.subr.mxu0 0.0
    %v422 = vand.u32 %v51, 4294901760
    %423 = vmatpush1.msra.mxu0 %v422
    %424 = vmatprep.subr.mxu0 0.0
    %v425 = vand.u32 %v52, 4294901760
    %426 = vmatpush1.msra.mxu0 %v425
    %427 = vmatprep.subr.mxu0 0.0
    %v428 = vand.u32 %v53, 4294901760
    %429 = vmatpush1.msra.mxu0 %v428
    %430 = vmatprep.subr.mxu0 0.0
    %v431 = vand.u32 %v54, 4294901760
    %432 = vmatpush1.msra.mxu0 %v431
    %433 = vmatprep.subr.mxu0 0.0
    %v434 = vand.u32 %v55, 4294901760
    %435 = vmatpush1.msra.mxu0 %v434
    %436 = vmatprep.subr.mxu0 0.0
    %v437 = vand.u32 %v56, 4294901760
    %438 = vmatpush1.msra.mxu0 %v437
    %439 = vmatprep.subr.mxu0 0.0
    %v440 = vand.u32 %v57, 4294901760
    %441 = vmatpush1.msra.mxu0 %v440
    %442 = vmatprep.subr.mxu0 0.0
    %v443 = vand.u32 %v58, 4294901760
    %444 = vmatpush1.msra.mxu0 %v443
    %445 = vmatprep.subr.mxu0 0.0
    %v446 = vand.u32 %v59, 4294901760
    %447 = vmatpush1.msra.mxu0 %v446
    %448 = vmatprep.subr.mxu0 0.0
    %v449 = vand.u32 %v60, 4294901760
    %450 = vmatpush1.msra.mxu0 %v449
    %451 = vmatprep.subr.mxu0 0.0
    %v452 = vand.u32 %v61, 4294901760
    %453 = vmatpush1.msra.mxu0 %v452
    %454 = vmatprep.subr.mxu0 0.0
    %v455 = vand.u32 %v62, 4294901760
    %456 = vmatpush1.msra.mxu0 %v455
    %457 = vmatprep.subr.mxu0 0.0
    %458 = vmatpush1.msra.mxu0 0.0
    %459 = vmatprep.subr.mxu0 0.0
    %460 = vmatpush1.msra.mxu0 0.0
    %461 = vmatprep.subr.mxu0 0.0
    %462 = vmatpush1.msra.mxu0 0.0
    %463 = vmatprep.subr.mxu0 0.0
    %464 = vmatpush1.msra.mxu0 0.0
    %465 = vmatprep.subr.mxu0 0.0
    %466 = vmatpush1.msra.mxu0 0.0
    %467 = vmatprep.subr.mxu0 0.0
    %468 = vmatpush1.msra.mxu0 0.0
    %469 = vmatprep.subr.mxu0 0.0
    %470 = vmatpush1.msra.mxu0 0.0
    %471 = vmatprep.subr.mxu0 0.0
    %472 = vmatpush1.msra.mxu0 0.0
    %473 = vmatprep.subr.mxu0 0.0
    %474 = vmatpush1.msra.mxu0 0.0
    %475 = vmatprep.subr.mxu0 0.0
    %476 = vmatpush1.msra.mxu0 0.0
    %477 = vmatprep.subr.mxu0 0.0
    %478 = vmatpush1.msra.mxu0 0.0
    %479 = vmatprep.subr.mxu0 0.0
    %480 = vmatpush1.msra.mxu0 0.0
    %481 = vmatprep.subr.mxu0 0.0
    %482 = vmatpush1.msra.mxu0 0.0
    %483 = vmatprep.subr.mxu0 0.0
    %484 = vmatpush1.msra.mxu0 0.0
    %485 = vmatprep.subr.mxu0 0.0
    %486 = vmatpush1.msra.mxu0 0.0
    %487 = vmatprep.subr.mxu0 0.0
    %488 = vmatpush1.msra.mxu0 0.0
    %489 = vmatprep.mubr.f32.mxu0 0.0
    %v490 = vand.u32 %v46, 4294901760
    %v491 = vsub.f32 %v46, %v490
    %v492 = vand.u32 %v491, 4294901760
    %493 = vmatmul.mubr.f32.gmra.mrb[0].mxu0 %v492
    %v494 = vpop.f32.mrb[0].mxu0
    %v495 = vadd.f32 %v406, %v494
    %v496 = vpop.f32.mrb[0].mxu0
    %497 = vdwg.mxu0
    %498 = vmatprep.subr.mxu0 0.0
    %v499 = vand.u32 %v47, 4294901760
    %v500 = vsub.f32 %v47, %v499
    %v501 = vand.u32 %v500, 4294901760
    %502 = vmatpush1.msra.mxu0 %v501
    %503 = vmatprep.subr.mxu0 0.0
    %v504 = vand.u32 %v48, 4294901760
    %v505 = vsub.f32 %v48, %v504
    %v506 = vand.u32 %v505, 4294901760
    %507 = vmatpush1.msra.mxu0 %v506
    %508 = vmatprep.subr.mxu0 0.0
    %v509 = vand.u32 %v49, 4294901760
    %v510 = vsub.f32 %v49, %v509
    %v511 = vand.u32 %v510, 4294901760
    %512 = vmatpush1.msra.mxu0 %v511
    %513 = vmatprep.subr.mxu0 0.0
    %v514 = vand.u32 %v50, 4294901760
    %v515 = vsub.f32 %v50, %v514
    %v516 = vand.u32 %v515, 4294901760
    %517 = vmatpush1.msra.mxu0 %v516
    %518 = vmatprep.subr.mxu0 0.0
    %v519 = vand.u32 %v51, 4294901760
    %v520 = vsub.f32 %v51, %v519
    %v521 = vand.u32 %v520, 4294901760
    %522 = vmatpush1.msra.mxu0 %v521
    %523 = vmatprep.subr.mxu0 0.0
    %v524 = vand.u32 %v52, 4294901760
    %v525 = vsub.f32 %v52, %v524
    %v526 = vand.u32 %v525, 4294901760
    %527 = vmatpush1.msra.mxu0 %v526
    %528 = vmatprep.subr.mxu0 0.0
    %v529 = vand.u32 %v53, 4294901760
    %v530 = vsub.f32 %v53, %v529
    %v531 = vand.u32 %v530, 4294901760
    %532 = vmatpush1.msra.mxu0 %v531
    %533 = vmatprep.subr.mxu0 0.0
    %v534 = vand.u32 %v54, 4294901760
    %v535 = vsub.f32 %v54, %v534
    %v536 = vand.u32 %v535, 4294901760
    %537 = vmatpush1.msra.mxu0 %v536
    %538 = vmatprep.subr.mxu0 0.0
    %v539 = vand.u32 %v55, 4294901760
    %v540 = vsub.f32 %v55, %v539
    %v541 = vand.u32 %v540, 4294901760
    %542 = vmatpush1.msra.mxu0 %v541
    %543 = vmatprep.subr.mxu0 0.0
    %v544 = vand.u32 %v56, 4294901760
    %v545 = vsub.f32 %v56, %v544
    %v546 = vand.u32 %v545, 4294901760
    %547 = vmatpush1.msra.mxu0 %v546
    %548 = vmatprep.subr.mxu0 0.0
    %v549 = vand.u32 %v57, 4294901760
    %v550 = vsub.f32 %v57, %v549
    %v551 = vand.u32 %v550, 4294901760
    %552 = vmatpush1.msra.mxu0 %v551
    %553 = vmatprep.subr.mxu0 0.0
    %v554 = vand.u32 %v58, 4294901760
    %v555 = vsub.f32 %v58, %v554
    %v556 = vand.u32 %v555, 4294901760
    %557 = vmatpush1.msra.mxu0 %v556
    %558 = vmatprep.subr.mxu0 0.0
    %v559 = vand.u32 %v59, 4294901760
    %v560 = vsub.f32 %v59, %v559
    %v561 = vand.u32 %v560, 4294901760
    %562 = vmatpush1.msra.mxu0 %v561
    %563 = vmatprep.subr.mxu0 0.0
    %v564 = vand.u32 %v60, 4294901760
    %v565 = vsub.f32 %v60, %v564
    %v566 = vand.u32 %v565, 4294901760
    %567 = vmatpush1.msra.mxu0 %v566
    %568 = vmatprep.subr.mxu0 0.0
    %v569 = vand.u32 %v61, 4294901760
    %v570 = vsub.f32 %v61, %v569
    %v571 = vand.u32 %v570, 4294901760
    %572 = vmatpush1.msra.mxu0 %v571
    %573 = vmatprep.subr.mxu0 0.0
    %v574 = vand.u32 %v62, 4294901760
    %v575 = vsub.f32 %v62, %v574
    %v576 = vand.u32 %v575, 4294901760
    %577 = vmatpush1.msra.mxu0 %v576
    %578 = vmatprep.subr.mxu0 0.0
    %579 = vmatpush1.msra.mxu0 0.0
    %580 = vmatprep.subr.mxu0 0.0
    %581 = vmatpush1.msra.mxu0 0.0
    %582 = vmatprep.subr.mxu0 0.0
    %583 = vmatpush1.msra.mxu0 0.0
    %584 = vmatprep.subr.mxu0 0.0
    %585 = vmatpush1.msra.mxu0 0.0
    %586 = vmatprep.subr.mxu0 0.0
    %587 = vmatpush1.msra.mxu0 0.0
    %588 = vmatprep.subr.mxu0 0.0
    %589 = vmatpush1.msra.mxu0 0.0
    %590 = vmatprep.subr.mxu0 0.0
    %591 = vmatpush1.msra.mxu0 0.0
    %592 = vmatprep.subr.mxu0 0.0
    %593 = vmatpush1.msra.mxu0 0.0
    %594 = vmatprep.subr.mxu0 0.0
    %595 = vmatpush1.msra.mxu0 0.0
    %596 = vmatprep.subr.mxu0 0.0
    %597 = vmatpush1.msra.mxu0 0.0
    %598 = vmatprep.subr.mxu0 0.0
    %599 = vmatpush1.msra.mxu0 0.0
    %600 = vmatprep.subr.mxu0 0.0
    %601 = vmatpush1.msra.mxu0 0.0
    %602 = vmatprep.subr.mxu0 0.0
    %603 = vmatpush1.msra.mxu0 0.0
    %604 = vmatprep.subr.mxu0 0.0
    %605 = vmatpush1.msra.mxu0 0.0
    %606 = vmatprep.subr.mxu0 0.0
    %607 = vmatpush1.msra.mxu0 0.0
    %608 = vmatprep.subr.mxu0 0.0
    %609 = vmatpush1.msra.mxu0 0.0
    %610 = vmatprep.mubr.f32.mxu0 0.0
    %v611 = vand.u32 %v46, 4294901760
    %612 = vmatmul.mubr.f32.gmra.mrb[0].mxu0 %v611
    %v613 = vpop.f32.mrb[0].mxu0
    %v614 = vadd.f32 %v495, %v613
    %v615 = vpop.f32.mrb[0].mxu0
    %616 = vdwg.mxu0
    %617 = vmatprep.subr.mxu0 0.0
    %v618 = vand.u32 %v47, 4294901760
    %619 = vmatpush1.msra.mxu0 %v618
    %620 = vmatprep.subr.mxu0 0.0
    %v621 = vand.u32 %v48, 4294901760
    %622 = vmatpush1.msra.mxu0 %v621
    %623 = vmatprep.subr.mxu0 0.0
    %v624 = vand.u32 %v49, 4294901760
    %625 = vmatpush1.msra.mxu0 %v624
    %626 = vmatprep.subr.mxu0 0.0
    %v627 = vand.u32 %v50, 4294901760
    %628 = vmatpush1.msra.mxu0 %v627
    %629 = vmatprep.subr.mxu0 0.0
    %v630 = vand.u32 %v51, 4294901760
    %631 = vmatpush1.msra.mxu0 %v630
    %632 = vmatprep.subr.mxu0 0.0
    %v633 = vand.u32 %v52, 4294901760
    %634 = vmatpush1.msra.mxu0 %v633
    %635 = vmatprep.subr.mxu0 0.0
    %v636 = vand.u32 %v53, 4294901760
    %637 = vmatpush1.msra.mxu0 %v636
    %638 = vmatprep.subr.mxu0 0.0
    %v639 = vand.u32 %v54, 4294901760
    %640 = vmatpush1.msra.mxu0 %v639
    %641 = vmatprep.subr.mxu0 0.0
    %v642 = vand.u32 %v55, 4294901760
    %643 = vmatpush1.msra.mxu0 %v642
    %644 = vmatprep.subr.mxu0 0.0
    %v645 = vand.u32 %v56, 4294901760
    %646 = vmatpush1.msra.mxu0 %v645
    %647 = vmatprep.subr.mxu0 0.0
    %v648 = vand.u32 %v57, 4294901760
    %649 = vmatpush1.msra.mxu0 %v648
    %650 = vmatprep.subr.mxu0 0.0
    %v651 = vand.u32 %v58, 4294901760
    %652 = vmatpush1.msra.mxu0 %v651
    %653 = vmatprep.subr.mxu0 0.0
    %v654 = vand.u32 %v59, 4294901760
    %655 = vmatpush1.msra.mxu0 %v654
    %656 = vmatprep.subr.mxu0 0.0
    %v657 = vand.u32 %v60, 4294901760
    %658 = vmatpush1.msra.mxu0 %v657
    %659 = vmatprep.subr.mxu0 0.0
    %v660 = vand.u32 %v61, 4294901760
    %661 = vmatpush1.msra.mxu0 %v660
    %662 = vmatprep.subr.mxu0 0.0
    %v663 = vand.u32 %v62, 4294901760
    %664 = vmatpush1.msra.mxu0 %v663
    %665 = vmatprep.subr.mxu0 0.0
    %666 = vmatpush1.msra.mxu0 0.0
    %667 = vmatprep.subr.mxu0 0.0
    %668 = vmatpush1.msra.mxu0 0.0
    %669 = vmatprep.subr.mxu0 0.0
    %670 = vmatpush1.msra.mxu0 0.0
    %671 = vmatprep.subr.mxu0 0.0
    %672 = vmatpush1.msra.mxu0 0.0
    %673 = vmatprep.subr.mxu0 0.0
    %674 = vmatpush1.msra.mxu0 0.0
    %675 = vmatprep.subr.mxu0 0.0
    %676 = vmatpush1.msra.mxu0 0.0
    %677 = vmatprep.subr.mxu0 0.0
    %678 = vmatpush1.msra.mxu0 0.0
    %679 = vmatprep.subr.mxu0 0.0
    %680 = vmatpush1.msra.mxu0 0.0
    %681 = vmatprep.subr.mxu0 0.0
    %682 = vmatpush1.msra.mxu0 0.0
    %683 = vmatprep.subr.mxu0 0.0
    %684 = vmatpush1.msra.mxu0 0.0
    %685 = vmatprep.subr.mxu0 0.0
    %686 = vmatpush1.msra.mxu0 0.0
    %687 = vmatprep.subr.mxu0 0.0
    %688 = vmatpush1.msra.mxu0 0.0
    %689 = vmatprep.subr.mxu0 0.0
    %690 = vmatpush1.msra.mxu0 0.0
    %691 = vmatprep.subr.mxu0 0.0
    %692 = vmatpush1.msra.mxu0 0.0
    %693 = vmatprep.subr.mxu0 0.0
    %694 = vmatpush1.msra.mxu0 0.0
    %695 = vmatprep.subr.mxu0 0.0
    %696 = vmatpush1.msra.mxu0 0.0
    %697 = vmatprep.mubr.f32.mxu0 0.0
    %v698 = vand.u32 %v46, 4294901760
    %699 = vmatmul.mubr.f32.gmra.mrb[0].mxu0 %v698
    %v700 = vpop.f32.mrb[0].mxu0
    %v701 = vadd.f32 %v614, %v700
    %v702 = vpop.f32.mrb[0].mxu0
    %703 = vdwg.mxu0
    %v704 = vsub.f32 %v46, %v701
    %v705 = vmul.f32 %v704, %v704
    %706 = vmatprep.subr.mxu0 0.0
    %v707 = vand.u32 %v47, 4294901760
    %708 = vmatpush1.msra.mxu0 %v707
    %709 = vmatprep.subr.mxu0 0.0
    %v710 = vand.u32 %v48, 4294901760
    %711 = vmatpush1.msra.mxu0 %v710
    %712 = vmatprep.subr.mxu0 0.0
    %v713 = vand.u32 %v49, 4294901760
    %714 = vmatpush1.msra.mxu0 %v713
    %715 = vmatprep.subr.mxu0 0.0
    %v716 = vand.u32 %v50, 4294901760
    %717 = vmatpush1.msra.mxu0 %v716
    %718 = vmatprep.subr.mxu0 0.0
    %v719 = vand.u32 %v51, 4294901760
    %720 = vmatpush1.msra.mxu0 %v719
    %721 = vmatprep.subr.mxu0 0.0
    %v722 = vand.u32 %v52, 4294901760
    %723 = vmatpush1.msra.mxu0 %v722
    %724 = vmatprep.subr.mxu0 0.0
    %v725 = vand.u32 %v53, 4294901760
    %726 = vmatpush1.msra.mxu0 %v725
    %727 = vmatprep.subr.mxu0 0.0
    %v728 = vand.u32 %v54, 4294901760
    %729 = vmatpush1.msra.mxu0 %v728
    %730 = vmatprep.subr.mxu0 0.0
    %v731 = vand.u32 %v55, 4294901760
    %732 = vmatpush1.msra.mxu0 %v731
    %733 = vmatprep.subr.mxu0 0.0
    %v734 = vand.u32 %v56, 4294901760
    %735 = vmatpush1.msra.mxu0 %v734
    %736 = vmatprep.subr.mxu0 0.0
    %v737 = vand.u32 %v57, 4294901760
    %738 = vmatpush1.msra.mxu0 %v737
    %739 = vmatprep.subr.mxu0 0.0
    %v740 = vand.u32 %v58, 4294901760
    %741 = vmatpush1.msra.mxu0 %v740
    %742 = vmatprep.subr.mxu0 0.0
    %v743 = vand.u32 %v59, 4294901760
    %744 = vmatpush1.msra.mxu0 %v743
    %745 = vmatprep.subr.mxu0 0.0
    %v746 = vand.u32 %v60, 4294901760
    %747 = vmatpush1.msra.mxu0 %v746
    %748 = vmatprep.subr.mxu0 0.0
    %v749 = vand.u32 %v61, 4294901760
    %750 = vmatpush1.msra.mxu0 %v749
    %751 = vmatprep.subr.mxu0 0.0
    %v752 = vand.u32 %v62, 4294901760
    %753 = vmatpush1.msra.mxu0 %v752
    %754 = vmatprep.subr.mxu0 0.0
    %755 = vmatpush1.msra.mxu0 0.0
    %756 = vmatprep.subr.mxu0 0.0
    %757 = vmatpush1.msra.mxu0 0.0
    %758 = vmatprep.subr.mxu0 0.0
    %759 = vmatpush1.msra.mxu0 0.0
    %760 = vmatprep.subr.mxu0 0.0
    %761 = vmatpush1.msra.mxu0 0.0
    %762 = vmatprep.subr.mxu0 0.0
    %763 = vmatpush1.msra.mxu0 0.0
    %764 = vmatprep.subr.mxu0 0.0
    %765 = vmatpush1.msra.mxu0 0.0
    %766 = vmatprep.subr.mxu0 0.0
    %767 = vmatpush1.msra.mxu0 0.0
    %768 = vmatprep.subr.mxu0 0.0
    %769 = vmatpush1.msra.mxu0 0.0
    %770 = vmatprep.subr.mxu0 0.0
    %771 = vmatpush1.msra.mxu0 0.0
    %772 = vmatprep.subr.mxu0 0.0
    %773 = vmatpush1.msra.mxu0 0.0
    %774 = vmatprep.subr.mxu0 0.0
    %775 = vmatpush1.msra.mxu0 0.0
    %776 = vmatprep.subr.mxu0 0.0
    %777 = vmatpush1.msra.mxu0 0.0
    %778 = vmatprep.subr.mxu0 0.0
    %779 = vmatpush1.msra.mxu0 0.0
    %780 = vmatprep.subr.mxu0 0.0
    %781 = vmatpush1.msra.mxu0 0.0
    %782 = vmatprep.subr.mxu0 0.0
    %783 = vmatpush1.msra.mxu0 0.0
    %784 = vmatprep.subr.mxu0 0.0
    %785 = vmatpush1.msra.mxu0 0.0
    %786 = vmatprep.mubr.f32.mxu0 0.0
    %v787 = vand.u32 %v705, 4294901760
    %v788 = vsub.f32 %v705, %v787
    %v789 = vand.u32 %v788, 4294901760
    %v790 = vsub.f32 %v788, %v789
    %v791 = vand.u32 %v790, 4294901760
    %792 = vmatmul.mubr.f32.gmra.mrb[0].mxu0 %v791
    %v793 = vpop.f32.mrb[0].mxu0
    %v794 = vadd.f32 1e-05, %v793
    %v795 = vpop.f32.mrb[0].mxu0
    %796 = vdwg.mxu0
    %797 = vmatprep.subr.mxu0 0.0
    %v798 = vand.u32 %v47, 4294901760
    %v799 = vsub.f32 %v47, %v798
    %v800 = vand.u32 %v799, 4294901760
    %v801 = vsub.f32 %v799, %v800
    %v802 = vand.u32 %v801, 4294901760
    %803 = vmatpush1.msra.mxu0 %v802
    %804 = vmatprep.subr.mxu0 0.0
    %v805 = vand.u32 %v48, 4294901760
    %v806 = vsub.f32 %v48, %v805
    %v807 = vand.u32 %v806, 4294901760
    %v808 = vsub.f32 %v806, %v807
    %v809 = vand.u32 %v808, 4294901760
    %810 = vmatpush1.msra.mxu0 %v809
    %811 = vmatprep.subr.mxu0 0.0
    %v812 = vand.u32 %v49, 4294901760
    %v813 = vsub.f32 %v49, %v812
    %v814 = vand.u32 %v813, 4294901760
    %v815 = vsub.f32 %v813, %v814
    %v816 = vand.u32 %v815, 4294901760
    %817 = vmatpush1.msra.mxu0 %v816
    %818 = vmatprep.subr.mxu0 0.0
    %v819 = vand.u32 %v50, 4294901760
    %v820 = vsub.f32 %v50, %v819
    %v821 = vand.u32 %v820, 4294901760
    %v822 = vsub.f32 %v820, %v821
    %v823 = vand.u32 %v822, 4294901760
    %824 = vmatpush1.msra.mxu0 %v823
    %825 = vmatprep.subr.mxu0 0.0
    %v826 = vand.u32 %v51, 4294901760
    %v827 = vsub.f32 %v51, %v826
    %v828 = vand.u32 %v827, 4294901760
    %v829 = vsub.f32 %v827, %v828
    %v830 = vand.u32 %v829, 4294901760
    %831 = vmatpush1.msra.mxu0 %v830
    %832 = vmatprep.subr.mxu0 0.0
    %v833 = vand.u32 %v52, 4294901760
    %v834 = vsub.f32 %v52, %v833
    %v835 = vand.u32 %v834, 4294901760
    %v836 = vsub.f32 %v834, %v835
    %v837 = vand.u32 %v836, 4294901760
    %838 = vmatpush1.msra.mxu0 %v837
    %839 = vmatprep.subr.mxu0 0.0
    %v840 = vand.u32 %v53, 4294901760
    %v841 = vsub.f32 %v53, %v840
    %v842 = vand.u32 %v841, 4294901760
    %v843 = vsub.f32 %v841, %v842
    %v844 = vand.u32 %v843, 4294901760
    %845 = vmatpush1.msra.mxu0 %v844
    %846 = vmatprep.subr.mxu0 0.0
    %v847 = vand.u32 %v54, 4294901760
    %v848 = vsub.f32 %v54, %v847
    %v849 = vand.u32 %v848, 4294901760
    %v850 = vsub.f32 %v848, %v849
    %v851 = vand.u32 %v850, 4294901760
    %852 = vmatpush1.msra.mxu0 %v851
    %853 = vmatprep.subr.mxu0 0.0
    %v854 = vand.u32 %v55, 4294901760
    %v855 = vsub.f32 %v55, %v854
    %v856 = vand.u32 %v855, 4294901760
    %v857 = vsub.f32 %v855, %v856
    %v858 = vand.u32 %v857, 4294901760
    %859 = vmatpush1.msra.mxu0 %v858
    %860 = vmatprep.subr.mxu0 0.0
    %v861 = vand.u32 %v56, 4294901760
    %v862 = vsub.f32 %v56, %v861
    %v863 = vand.u32 %v862, 4294901760
    %v864 = vsub.f32 %v862, %v863
    %v865 = vand.u32 %v864, 4294901760
    %866 = vmatpush1.msra.mxu0 %v865
    %867 = vmatprep.subr.mxu0 0.0
    %v868 = vand.u32 %v57, 4294901760
    %v869 = vsub.f32 %v57, %v868
    %v870 = vand.u32 %v869, 4294901760
    %v871 = vsub.f32 %v869, %v870
    %v872 = vand.u32 %v871, 4294901760
    %873 = vmatpush1.msra.mxu0 %v872
    %874 = vmatprep.subr.mxu0 0.0
    %v875 = vand.u32 %v58, 4294901760
    %v876 = vsub.f32 %v58, %v875
    %v877 = vand.u32 %v876, 4294901760
    %v878 = vsub.f32 %v876, %v877
    %v879 = vand.u32 %v878, 4294901760
    %880 = vmatpush1.msra.mxu0 %v879
    %881 = vmatprep.subr.mxu0 0.0
    %v882 = vand.u32 %v59, 4294901760
    %v883 = vsub.f32 %v59, %v882
    %v884 = vand.u32 %v883, 4294901760
    %v885 = vsub.f32 %v883, %v884
    %v886 = vand.u32 %v885, 4294901760
    %887 = vmatpush1.msra.mxu0 %v886
    %888 = vmatprep.subr.mxu0 0.0
    %v889 = vand.u32 %v60, 4294901760
    %v890 = vsub.f32 %v60, %v889
    %v891 = vand.u32 %v890, 4294901760
    %v892 = vsub.f32 %v890, %v891
    %v893 = vand.u32 %v892, 4294901760
    %894 = vmatpush1.msra.mxu0 %v893
    %895 = vmatprep.subr.mxu0 0.0
    %v896 = vand.u32 %v61, 4294901760
    %v897 = vsub.f32 %v61, %v896
    %v898 = vand.u32 %v897, 4294901760
    %v899 = vsub.f32 %v897, %v898
    %v900 = vand.u32 %v899, 4294901760
    %901 = vmatpush1.msra.mxu0 %v900
    %902 = vmatprep.subr.mxu0 0.0
    %v903 = vand.u32 %v62, 4294901760
    %v904 = vsub.f32 %v62, %v903
    %v905 = vand.u32 %v904, 4294901760
    %v906 = vsub.f32 %v904, %v905
    %v907 = vand.u32 %v906, 4294901760
    %908 = vmatpush1.msra.mxu0 %v907
    %909 = vmatprep.subr.mxu0 0.0
    %910 = vmatpush1.msra.mxu0 0.0
    %911 = vmatprep.subr.mxu0 0.0
    %912 = vmatpush1.msra.mxu0 0.0
    %913 = vmatprep.subr.mxu0 0.0
    %914 = vmatpush1.msra.mxu0 0.0
    %915 = vmatprep.subr.mxu0 0.0
    %916 = vmatpush1.msra.mxu0 0.0
    %917 = vmatprep.subr.mxu0 0.0
    %918 = vmatpush1.msra.mxu0 0.0
    %919 = vmatprep.subr.mxu0 0.0
    %920 = vmatpush1.msra.mxu0 0.0
    %921 = vmatprep.subr.mxu0 0.0
    %922 = vmatpush1.msra.mxu0 0.0
    %923 = vmatprep.subr.mxu0 0.0
    %924 = vmatpush1.msra.mxu0 0.0
    %925 = vmatprep.subr.mxu0 0.0
    %926 = vmatpush1.msra.mxu0 0.0
    %927 = vmatprep.subr.mxu0 0.0
    %928 = vmatpush1.msra.mxu0 0.0
    %929 = vmatprep.subr.mxu0 0.0
    %930 = vmatpush1.msra.mxu0 0.0
    %931 = vmatprep.subr.mxu0 0.0
    %932 = vmatpush1.msra.mxu0 0.0
    %933 = vmatprep.subr.mxu0 0.0
    %934 = vmatpush1.msra.mxu0 0.0
    %935 = vmatprep.subr.mxu0 0.0
    %936 = vmatpush1.msra.mxu0 0.0
    %937 = vmatprep.subr.mxu0 0.0
    %938 = vmatpush1.msra.mxu0 0.0
    %939 = vmatprep.subr.mxu0 0.0
    %940 = vmatpush1.msra.mxu0 0.0
    %941 = vmatprep.mubr.f32.mxu0 0.0
    %v942 = vand.u32 %v705, 4294901760
    %943 = vmatmul.mubr.f32.gmra.mrb[0].mxu0 %v942
    %v944 = vpop.f32.mrb[0].mxu0
    %v945 = vadd.f32 %v794, %v944
    %v946 = vpop.f32.mrb[0].mxu0
    %947 = vdwg.mxu0
    %948 = vmatprep.subr.mxu0 0.0
    %v949 = vand.u32 %v47, 4294901760
    %v950 = vsub.f32 %v47, %v949
    %951 = vmatpush1.msra.mxu0 %v950
    %952 = vmatprep.subr.mxu0 0.0
    %v953 = vand.u32 %v48, 4294901760
    %v954 = vsub.f32 %v48, %v953
    %955 = vmatpush1.msra.mxu0 %v954
    %956 = vmatprep.subr.mxu0 0.0
    %v957 = vand.u32 %v49, 4294901760
    %v958 = vsub.f32 %v49, %v957
    %959 = vmatpush1.msra.mxu0 %v958
    %960 = vmatprep.subr.mxu0 0.0
    %v961 = vand.u32 %v50, 4294901760
    %v962 = vsub.f32 %v50, %v961
    %963 = vmatpush1.msra.mxu0 %v962
    %964 = vmatprep.subr.mxu0 0.0
    %v965 = vand.u32 %v51, 4294901760
    %v966 = vsub.f32 %v51, %v965
    %967 = vmatpush1.msra.mxu0 %v966
    %968 = vmatprep.subr.mxu0 0.0
    %v969 = vand.u32 %v52, 4294901760
    %v970 = vsub.f32 %v52, %v969
    %971 = vmatpush1.msra.mxu0 %v970
    %972 = vmatprep.subr.mxu0 0.0
    %v973 = vand.u32 %v53, 4294901760
    %v974 = vsub.f32 %v53, %v973
    %975 = vmatpush1.msra.mxu0 %v974
    %976 = vmatprep.subr.mxu0 0.0
    %v977 = vand.u32 %v54, 4294901760
    %v978 = vsub.f32 %v54, %v977
    %979 = vmatpush1.msra.mxu0 %v978
    %980 = vmatprep.subr.mxu0 0.0
    %v981 = vand.u32 %v55, 4294901760
    %v982 = vsub.f32 %v55, %v981
    %983 = vmatpush1.msra.mxu0 %v982
    %984 = vmatprep.subr.mxu0 0.0
    %v985 = vand.u32 %v56, 4294901760
    %v986 = vsub.f32 %v56, %v985
    %987 = vmatpush1.msra.mxu0 %v986
    %988 = vmatprep.subr.mxu0 0.0
    %v989 = vand.u32 %v57, 4294901760
    %v990 = vsub.f32 %v57, %v989
    %991 = vmatpush1.msra.mxu0 %v990
    %992 = vmatprep.subr.mxu0 0.0
    %v993 = vand.u32 %v58, 4294901760
    %v994 = vsub.f32 %v58, %v993
    %995 = vmatpush1.msra.mxu0 %v994
    %996 = vmatprep.subr.mxu0 0.0
    %v997 = vand.u32 %v59, 4294901760
    %v998 = vsub.f32 %v59, %v997
    %999 = vmatpush1.msra.mxu0 %v998
    %1000 = vmatprep.subr.mxu0 0.0
    %v1001 = vand.u32 %v60, 4294901760
    %v1002 = vsub.f32 %v60, %v1001
    %1003 = vmatpush1.msra.mxu0 %v1002
    %1004 = vmatprep.subr.mxu0 0.0
    %v1005 = vand.u32 %v61, 4294901760
    %v1006 = vsub.f32 %v61, %v1005
    %1007 = vmatpush1.msra.mxu0 %v1006
    %1008 = vmatprep.subr.mxu0 0.0
    %v1009 = vand.u32 %v62, 4294901760
    %v1010 = vsub.f32 %v62, %v1009
    %1011 = vmatpush1.msra.mxu0 %v1010
    %1012 = vmatprep.subr.mxu0 0.0
    %1013 = vmatpush1.msra.mxu0 0.0
    %1014 = vmatprep.subr.mxu0 0.0
    %1015 = vmatpush1.msra.mxu0 0.0
    %1016 = vmatprep.subr.mxu0 0.0
    %1017 = vmatpush1.msra.mxu0 0.0
    %1018 = vmatprep.subr.mxu0 0.0
    %1019 = vmatpush1.msra.mxu0 0.0
    %1020 = vmatprep.subr.mxu0 0.0
    %1021 = vmatpush1.msra.mxu0 0.0
    %1022 = vmatprep.subr.mxu0 0.0
    %1023 = vmatpush1.msra.mxu0 0.0
    %1024 = vmatprep.subr.mxu0 0.0
    %1025 = vmatpush1.msra.mxu0 0.0
    %1026 = vmatprep.subr.mxu0 0.0
    %1027 = vmatpush1.msra.mxu0 0.0
    %1028 = vmatprep.subr.mxu0 0.0
    %1029 = vmatpush1.msra.mxu0 0.0
    %1030 = vmatprep.subr.mxu0 0.0
    %1031 = vmatpush1.msra.mxu0 0.0
    %1032 = vmatprep.subr.mxu0 0.0
    %1033 = vmatpush1.msra.mxu0 0.0
    %1034 = vmatprep.subr.mxu0 0.0
    %1035 = vmatpush1.msra.mxu0 0.0
    %1036 = vmatprep.subr.mxu0 0.0
    %1037 = vmatpush1.msra.mxu0 0.0
    %1038 = vmatprep.subr.mxu0 0.0
    %1039 = vmatpush1.msra.mxu0 0.0
    %1040 = vmatprep.subr.mxu0 0.0
    %1041 = vmatpush1.msra.mxu0 0.0
    %1042 = vmatprep.subr.mxu0 0.0
    %1043 = vmatpush1.msra.mxu0 0.0
    %1044 = vmatprep.mubr.f32.mxu0 0.0
    %v1045 = vand.u32 %v705, 4294901760
    %v1046 = vsub.f32 %v705, %v1045
    %1047 = vmatmul.mubr.f32.gmra.mrb[0].mxu0 %v1046
    %v1048 = vpop.f32.mrb[0].mxu0
    %v1049 = vadd.f32 %v945, %v1048
    %v1050 = vpop.f32.mrb[0].mxu0
    %1051 = vdwg.mxu0
    %1052 = vmatprep.subr.mxu0 0.0
    %v1053 = vand.u32 %v47, 4294901760
    %1054 = vmatpush1.msra.mxu0 %v1053
    %1055 = vmatprep.subr.mxu0 0.0
    %v1056 = vand.u32 %v48, 4294901760
    %1057 = vmatpush1.msra.mxu0 %v1056
    %1058 = vmatprep.subr.mxu0 0.0
    %v1059 = vand.u32 %v49, 4294901760
    %1060 = vmatpush1.msra.mxu0 %v1059
    %1061 = vmatprep.subr.mxu0 0.0
    %v1062 = vand.u32 %v50, 4294901760
    %1063 = vmatpush1.msra.mxu0 %v1062
    %1064 = vmatprep.subr.mxu0 0.0
    %v1065 = vand.u32 %v51, 4294901760
    %1066 = vmatpush1.msra.mxu0 %v1065
    %1067 = vmatprep.subr.mxu0 0.0
    %v1068 = vand.u32 %v52, 4294901760
    %1069 = vmatpush1.msra.mxu0 %v1068
    %1070 = vmatprep.subr.mxu0 0.0
    %v1071 = vand.u32 %v53, 4294901760
    %1072 = vmatpush1.msra.mxu0 %v1071
    %1073 = vmatprep.subr.mxu0 0.0
    %v1074 = vand.u32 %v54, 4294901760
    %1075 = vmatpush1.msra.mxu0 %v1074
    %1076 = vmatprep.subr.mxu0 0.0
    %v1077 = vand.u32 %v55, 4294901760
    %1078 = vmatpush1.msra.mxu0 %v1077
    %1079 = vmatprep.subr.mxu0 0.0
    %v1080 = vand.u32 %v56, 4294901760
    %1081 = vmatpush1.msra.mxu0 %v1080
    %1082 = vmatprep.subr.mxu0 0.0
    %v1083 = vand.u32 %v57, 4294901760
    %1084 = vmatpush1.msra.mxu0 %v1083
    %1085 = vmatprep.subr.mxu0 0.0
    %v1086 = vand.u32 %v58, 4294901760
    %1087 = vmatpush1.msra.mxu0 %v1086
    %1088 = vmatprep.subr.mxu0 0.0
    %v1089 = vand.u32 %v59, 4294901760
    %1090 = vmatpush1.msra.mxu0 %v1089
    %1091 = vmatprep.subr.mxu0 0.0
    %v1092 = vand.u32 %v60, 4294901760
    %1093 = vmatpush1.msra.mxu0 %v1092
    %1094 = vmatprep.subr.mxu0 0.0
    %v1095 = vand.u32 %v61, 4294901760
    %1096 = vmatpush1.msra.mxu0 %v1095
    %1097 = vmatprep.subr.mxu0 0.0
    %v1098 = vand.u32 %v62, 4294901760
    %1099 = vmatpush1.msra.mxu0 %v1098
    %1100 = vmatprep.subr.mxu0 0.0
    %1101 = vmatpush1.msra.mxu0 0.0
    %1102 = vmatprep.subr.mxu0 0.0
    %1103 = vmatpush1.msra.mxu0 0.0
    %1104 = vmatprep.subr.mxu0 0.0
    %1105 = vmatpush1.msra.mxu0 0.0
    %1106 = vmatprep.subr.mxu0 0.0
    %1107 = vmatpush1.msra.mxu0 0.0
    %1108 = vmatprep.subr.mxu0 0.0
    %1109 = vmatpush1.msra.mxu0 0.0
    %1110 = vmatprep.subr.mxu0 0.0
    %1111 = vmatpush1.msra.mxu0 0.0
    %1112 = vmatprep.subr.mxu0 0.0
    %1113 = vmatpush1.msra.mxu0 0.0
    %1114 = vmatprep.subr.mxu0 0.0
    %1115 = vmatpush1.msra.mxu0 0.0
    %1116 = vmatprep.subr.mxu0 0.0
    %1117 = vmatpush1.msra.mxu0 0.0
    %1118 = vmatprep.subr.mxu0 0.0
    %1119 = vmatpush1.msra.mxu0 0.0
    %1120 = vmatprep.subr.mxu0 0.0
    %1121 = vmatpush1.msra.mxu0 0.0
    %1122 = vmatprep.subr.mxu0 0.0
    %1123 = vmatpush1.msra.mxu0 0.0
    %1124 = vmatprep.subr.mxu0 0.0
    %1125 = vmatpush1.msra.mxu0 0.0
    %1126 = vmatprep.subr.mxu0 0.0
    %1127 = vmatpush1.msra.mxu0 0.0
    %1128 = vmatprep.subr.mxu0 0.0
    %1129 = vmatpush1.msra.mxu0 0.0
    %1130 = vmatprep.subr.mxu0 0.0
    %1131 = vmatpush1.msra.mxu0 0.0
    %1132 = vmatprep.mubr.f32.mxu0 0.0
    %v1133 = vand.u32 %v705, 4294901760
    %v1134 = vsub.f32 %v705, %v1133
    %v1135 = vand.u32 %v1134, 4294901760
    %1136 = vmatmul.mubr.f32.gmra.mrb[0].mxu0 %v1135
    %v1137 = vpop.f32.mrb[0].mxu0
    %v1138 = vadd.f32 %v1049, %v1137
    %v1139 = vpop.f32.mrb[0].mxu0
    %1140 = vdwg.mxu0
    %1141 = vmatprep.subr.mxu0 0.0
    %v1142 = vand.u32 %v47, 4294901760
    %v1143 = vsub.f32 %v47, %v1142
    %v1144 = vand.u32 %v1143, 4294901760
    %1145 = vmatpush1.msra.mxu0 %v1144
    %1146 = vmatprep.subr.mxu0 0.0
    %v1147 = vand.u32 %v48, 4294901760
    %v1148 = vsub.f32 %v48, %v1147
    %v1149 = vand.u32 %v1148, 4294901760
    %1150 = vmatpush1.msra.mxu0 %v1149
    %1151 = vmatprep.subr.mxu0 0.0
    %v1152 = vand.u32 %v49, 4294901760
    %v1153 = vsub.f32 %v49, %v1152
    %v1154 = vand.u32 %v1153, 4294901760
    %1155 = vmatpush1.msra.mxu0 %v1154
    %1156 = vmatprep.subr.mxu0 0.0
    %v1157 = vand.u32 %v50, 4294901760
    %v1158 = vsub.f32 %v50, %v1157
    %v1159 = vand.u32 %v1158, 4294901760
    %1160 = vmatpush1.msra.mxu0 %v1159
    %1161 = vmatprep.subr.mxu0 0.0
    %v1162 = vand.u32 %v51, 4294901760
    %v1163 = vsub.f32 %v51, %v1162
    %v1164 = vand.u32 %v1163, 4294901760
    %1165 = vmatpush1.msra.mxu0 %v1164
    %1166 = vmatprep.subr.mxu0 0.0
    %v1167 = vand.u32 %v52, 4294901760
    %v1168 = vsub.f32 %v52, %v1167
    %v1169 = vand.u32 %v1168, 4294901760
    %1170 = vmatpush1.msra.mxu0 %v1169
    %1171 = vmatprep.subr.mxu0 0.0
    %v1172 = vand.u32 %v53, 4294901760
    %v1173 = vsub.f32 %v53, %v1172
    %v1174 = vand.u32 %v1173, 4294901760
    %1175 = vmatpush1.msra.mxu0 %v1174
    %1176 = vmatprep.subr.mxu0 0.0
    %v1177 = vand.u32 %v54, 4294901760
    %v1178 = vsub.f32 %v54, %v1177
    %v1179 = vand.u32 %v1178, 4294901760
    %1180 = vmatpush1.msra.mxu0 %v1179
    %1181 = vmatprep.subr.mxu0 0.0
    %v1182 = vand.u32 %v55, 4294901760
    %v1183 = vsub.f32 %v55, %v1182
    %v1184 = vand.u32 %v1183, 4294901760
    %1185 = vmatpush1.msra.mxu0 %v1184
    %1186 = vmatprep.subr.mxu0 0.0
    %v1187 = vand.u32 %v56, 4294901760
    %v1188 = vsub.f32 %v56, %v1187
    %v1189 = vand.u32 %v1188, 4294901760
    %1190 = vmatpush1.msra.mxu0 %v1189
    %1191 = vmatprep.subr.mxu0 0.0
    %v1192 = vand.u32 %v57, 4294901760
    %v1193 = vsub.f32 %v57, %v1192
    %v1194 = vand.u32 %v1193, 4294901760
    %1195 = vmatpush1.msra.mxu0 %v1194
    %1196 = vmatprep.subr.mxu0 0.0
    %v1197 = vand.u32 %v58, 4294901760
    %v1198 = vsub.f32 %v58, %v1197
    %v1199 = vand.u32 %v1198, 4294901760
    %1200 = vmatpush1.msra.mxu0 %v1199
    %1201 = vmatprep.subr.mxu0 0.0
    %v1202 = vand.u32 %v59, 4294901760
    %v1203 = vsub.f32 %v59, %v1202
    %v1204 = vand.u32 %v1203, 4294901760
    %1205 = vmatpush1.msra.mxu0 %v1204
    %1206 = vmatprep.subr.mxu0 0.0
    %v1207 = vand.u32 %v60, 4294901760
    %v1208 = vsub.f32 %v60, %v1207
    %v1209 = vand.u32 %v1208, 4294901760
    %1210 = vmatpush1.msra.mxu0 %v1209
    %1211 = vmatprep.subr.mxu0 0.0
    %v1212 = vand.u32 %v61, 4294901760
    %v1213 = vsub.f32 %v61, %v1212
    %v1214 = vand.u32 %v1213, 4294901760
    %1215 = vmatpush1.msra.mxu0 %v1214
    %1216 = vmatprep.subr.mxu0 0.0
    %v1217 = vand.u32 %v62, 4294901760
    %v1218 = vsub.f32 %v62, %v1217
    %v1219 = vand.u32 %v1218, 4294901760
    %1220 = vmatpush1.msra.mxu0 %v1219
    %1221 = vmatprep.subr.mxu0 0.0
    %1222 = vmatpush1.msra.mxu0 0.0
    %1223 = vmatprep.subr.mxu0 0.0
    %1224 = vmatpush1.msra.mxu0 0.0
    %1225 = vmatprep.subr.mxu0 0.0
    %1226 = vmatpush1.msra.mxu0 0.0
    %1227 = vmatprep.subr.mxu0 0.0
    %1228 = vmatpush1.msra.mxu0 0.0
    %1229 = vmatprep.subr.mxu0 0.0
    %1230 = vmatpush1.msra.mxu0 0.0
    %1231 = vmatprep.subr.mxu0 0.0
    %1232 = vmatpush1.msra.mxu0 0.0
    %1233 = vmatprep.subr.mxu0 0.0
    %1234 = vmatpush1.msra.mxu0 0.0
    %1235 = vmatprep.subr.mxu0 0.0
    %1236 = vmatpush1.msra.mxu0 0.0
    %1237 = vmatprep.subr.mxu0 0.0
    %1238 = vmatpush1.msra.mxu0 0.0
    %1239 = vmatprep.subr.mxu0 0.0
    %1240 = vmatpush1.msra.mxu0 0.0
    %1241 = vmatprep.subr.mxu0 0.0
    %1242 = vmatpush1.msra.mxu0 0.0
    %1243 = vmatprep.subr.mxu0 0.0
    %1244 = vmatpush1.msra.mxu0 0.0
    %1245 = vmatprep.subr.mxu0 0.0
    %1246 = vmatpush1.msra.mxu0 0.0
    %1247 = vmatprep.subr.mxu0 0.0
    %1248 = vmatpush1.msra.mxu0 0.0
    %1249 = vmatprep.subr.mxu0 0.0
    %1250 = vmatpush1.msra.mxu0 0.0
    %1251 = vmatprep.subr.mxu0 0.0
    %1252 = vmatpush1.msra.mxu0 0.0
    %1253 = vmatprep.mubr.f32.mxu0 0.0
    %v1254 = vand.u32 %v705, 4294901760
    %1255 = vmatmul.mubr.f32.gmra.mrb[0].mxu0 %v1254
    %v1256 = vpop.f32.mrb[0].mxu0
    %v1257 = vadd.f32 %v1138, %v1256
    %v1258 = vpop.f32.mrb[0].mxu0
    %1259 = vdwg.mxu0
    %1260 = vmatprep.subr.mxu0 0.0
    %v1261 = vand.u32 %v47, 4294901760
    %1262 = vmatpush1.msra.mxu0 %v1261
    %1263 = vmatprep.subr.mxu0 0.0
    %v1264 = vand.u32 %v48, 4294901760
    %1265 = vmatpush1.msra.mxu0 %v1264
    %1266 = vmatprep.subr.mxu0 0.0
    %v1267 = vand.u32 %v49, 4294901760
    %1268 = vmatpush1.msra.mxu0 %v1267
    %1269 = vmatprep.subr.mxu0 0.0
    %v1270 = vand.u32 %v50, 4294901760
    %1271 = vmatpush1.msra.mxu0 %v1270
    %1272 = vmatprep.subr.mxu0 0.0
    %v1273 = vand.u32 %v51, 4294901760
    %1274 = vmatpush1.msra.mxu0 %v1273
    %1275 = vmatprep.subr.mxu0 0.0
    %v1276 = vand.u32 %v52, 4294901760
    %1277 = vmatpush1.msra.mxu0 %v1276
    %1278 = vmatprep.subr.mxu0 0.0
    %v1279 = vand.u32 %v53, 4294901760
    %1280 = vmatpush1.msra.mxu0 %v1279
    %1281 = vmatprep.subr.mxu0 0.0
    %v1282 = vand.u32 %v54, 4294901760
    %1283 = vmatpush1.msra.mxu0 %v1282
    %1284 = vmatprep.subr.mxu0 0.0
    %v1285 = vand.u32 %v55, 4294901760
    %1286 = vmatpush1.msra.mxu0 %v1285
    %1287 = vmatprep.subr.mxu0 0.0
    %v1288 = vand.u32 %v56, 4294901760
    %1289 = vmatpush1.msra.mxu0 %v1288
    %1290 = vmatprep.subr.mxu0 0.0
    %v1291 = vand.u32 %v57, 4294901760
    %1292 = vmatpush1.msra.mxu0 %v1291
    %1293 = vmatprep.subr.mxu0 0.0
    %v1294 = vand.u32 %v58, 4294901760
    %1295 = vmatpush1.msra.mxu0 %v1294
    %1296 = vmatprep.subr.mxu0 0.0
    %v1297 = vand.u32 %v59, 4294901760
    %1298 = vmatpush1.msra.mxu0 %v1297
    %1299 = vmatprep.subr.mxu0 0.0
    %v1300 = vand.u32 %v60, 4294901760
    %1301 = vmatpush1.msra.mxu0 %v1300
    %1302 = vmatprep.subr.mxu0 0.0
    %v1303 = vand.u32 %v61, 4294901760
    %1304 = vmatpush1.msra.mxu0 %v1303
    %1305 = vmatprep.subr.mxu0 0.0
    %v1306 = vand.u32 %v62, 4294901760
    %1307 = vmatpush1.msra.mxu0 %v1306
    %1308 = vmatprep.subr.mxu0 0.0
    %1309 = vmatpush1.msra.mxu0 0.0
    %1310 = vmatprep.subr.mxu0 0.0
    %1311 = vmatpush1.msra.mxu0 0.0
    %1312 = vmatprep.subr.mxu0 0.0
    %1313 = vmatpush1.msra.mxu0 0.0
    %1314 = vmatprep.subr.mxu0 0.0
    %1315 = vmatpush1.msra.mxu0 0.0
    %1316 = vmatprep.subr.mxu0 0.0
    %1317 = vmatpush1.msra.mxu0 0.0
    %1318 = vmatprep.subr.mxu0 0.0
    %1319 = vmatpush1.msra.mxu0 0.0
    %1320 = vmatprep.subr.mxu0 0.0
    %1321 = vmatpush1.msra.mxu0 0.0
    %1322 = vmatprep.subr.mxu0 0.0
    %1323 = vmatpush1.msra.mxu0 0.0
    %1324 = vmatprep.subr.mxu0 0.0
    %1325 = vmatpush1.msra.mxu0 0.0
    %1326 = vmatprep.subr.mxu0 0.0
    %1327 = vmatpush1.msra.mxu0 0.0
    %1328 = vmatprep.subr.mxu0 0.0
    %1329 = vmatpush1.msra.mxu0 0.0
    %1330 = vmatprep.subr.mxu0 0.0
    %1331 = vmatpush1.msra.mxu0 0.0
    %1332 = vmatprep.subr.mxu0 0.0
    %1333 = vmatpush1.msra.mxu0 0.0
    %1334 = vmatprep.subr.mxu0 0.0
    %1335 = vmatpush1.msra.mxu0 0.0
    %1336 = vmatprep.subr.mxu0 0.0
    %1337 = vmatpush1.msra.mxu0 0.0
    %1338 = vmatprep.subr.mxu0 0.0
    %1339 = vmatpush1.msra.mxu0 0.0
    %1340 = vmatprep.mubr.f32.mxu0 0.0
    %v1341 = vand.u32 %v705, 4294901760
    %1342 = vmatmul.mubr.f32.gmra.mrb[0].mxu0 %v1341
    %v1343 = vpop.f32.mrb[0].mxu0
    %v1344 = vadd.f32 %v1257, %v1343
    %v1345 = vpop.f32.mrb[0].mxu0
    %1346 = vdwg.mxu0
    %v1347 = vrsqrt.pop %v1344
    %v1348 = vmul.f32 %v704, %v1347
    %v1349 = vld [vmem:[%s2] sm:$0x1]
    %v1351 = vlaneseq
    %v1352 = vshrl.u32 %v1351, 7
    %v1353 = vsub.s32 0, %v1352
    %v1354 = vrot.slane %v1349, %v1353
    %v1356 = vmul.f32 %v1348, %v1354
    %v1357 = vld [vmem:[%s3] sm:$0x1]
    %v1359 = vlaneseq
    %v1360 = vshrl.u32 %v1359, 7
    %v1361 = vsub.s32 0, %v1360
    %v1362 = vrot.slane %v1357, %v1361
    %v1364 = vadd.f32 %v1356, %v1362
    %1365 = vst [vmem:[#allocation7] sm:$0xff] %v1364
    // Predicated region
    $region26: #{tpu_custom_call.1} parent=1 // pred_check
      _
    $region27: #{tpu_custom_call.1} parent=1 // pred_check_branch
      %1367 = sbr.rel (0) target = $region29
    $region28: #{tpu_custom_call.1} parent=1 // pred_region
      %s1369 = ssub.s32 128, 64
      %1370 = vsyncadd [#allocation4], %s1369
      %s1371 = sshll.u32 [#allocation7], 4
      %s1372 = int_to_ptr.vmem [resolvable:$true] %s1371
      %1377 = dma.vmem_to_hbm [thread:$0]  %s1372, 64, %s4, [#allocation4], 64, 64, 4
    $region29: #{tpu_custom_call.1} parent=1 // pred_fallthru
      _
    // Predicated region
    $region30: #{tpu_custom_call.1} parent=1 // pred_check
      _
    $region31: #{tpu_custom_call.1} parent=1 // pred_check_branch
      %1379 = sbr.rel (0) target = $region33
    $region32: #{tpu_custom_call.1} parent=1 // pred_region
      %1380 = dma.done [#allocation4], 128
    $region33: #{tpu_custom_call.1} parent=1 // pred_fallthru
      _
    %1381 = vsyncpa [#allocation3], 1
    %1382 = vsyncpa [#allocation6], 1
    %1383 = vsyncpa [#allocation4], 1

</llo_original>
